<compile_context>
chip_gen: v7x
topology: tpu7x:2x2x1
jax: 0.10.0
libtpu: 0.0.40
codegen_flags: <defaults>
</compile_context>

<pallas_src>
import jax
import jax.numpy as jnp
from jax.experimental import pallas as pl
from jax.experimental.pallas import tpu as pltpu

_LANES = 128
_SUBLANES = 8


def _make_kernel(rows, tr, steps_per_chunk, mask_needed):
    def kernel(a_ref, p_ref, n_ref, dp_ref, dn_ref):
        step = pl.program_id(1)

        @pl.when(step == 0)
        def _init():
            dp_ref[...] = jnp.zeros_like(dp_ref)
            dn_ref[...] = jnp.zeros_like(dn_ref)

        a = a_ref[...].astype(jnp.float32)
        p = p_ref[...].astype(jnp.float32)
        n = n_ref[...].astype(jnp.float32)

        d_p = a - p
        d_n = a - n
        sq_p = d_p * d_p
        sq_n = d_n * d_n

        if mask_needed:
            # Logical (unclamped) tile index; rows at/after `rows` are either the
            # ragged tail of the last real tile or a clamped duplicate tile -> 0.
            tile = pl.program_id(0) * steps_per_chunk + step
            row_ids = tile * tr + jax.lax.broadcasted_iota(
                jnp.int32, (tr, _LANES), 0)
            valid = row_ids < rows
            sq_p = jnp.where(valid, sq_p, 0.0)
            sq_n = jnp.where(valid, sq_n, 0.0)

        # Pure-VPU accumulate into the (8, 128) lane/sublane partials held in this
        # chunk's resident output block (written back to HBM once per chunk).
        dp_ref[...] += jnp.sum(
            sq_p.reshape(tr // _SUBLANES, _SUBLANES, _LANES), axis=0)[None]
        dn_ref[...] += jnp.sum(
            sq_n.reshape(tr // _SUBLANES, _SUBLANES, _LANES), axis=0)[None]

    return kernel


def softplus_triplet_loss(anchor, positive, negative, *,
                          rows_per_tile=2048, num_chunks=2):
    assert anchor.shape == positive.shape == negative.shape
    assert anchor.dtype == positive.dtype == negative.dtype
    total = anchor.size
    assert total > 0
    itemsize = jnp.dtype(anchor.dtype).itemsize
    # Native sublane pack: 8 rows for f32, 16 for bf16, 32 for int8/fp8.
    pack = max(_SUBLANES, 32 // itemsize)

    rows = -(-total // _LANES)
    lane_total = rows * _LANES

    def prep(x):
        flat = x.reshape(-1)                  # native dtype, no f32 up-cast
        if lane_total != total:
            # Rare ragged-lane case only: pad < 128 elements so the flat array is
            # reshapeable to (rows, 128). Zero padding is exact for this loss.
            flat = jnp.pad(flat, (0, lane_total - total))
        return flat.reshape(rows, _LANES)

    a2, p2, n2 = prep(anchor), prep(positive), prep(negative)

    # Tile rows: clamp to request, round up to the dtype's sublane pack.
    tr = min(rows_per_tile, rows)
    tr = -(-tr // pack) * pack
    num_tiles = -(-rows // tr)

    # Chunking along a leading "parallel" axis (both TensorCores on v7x).
    chunks = max(1, min(num_chunks, num_tiles))
    steps = -(-num_tiles // chunks)

    # Ragged tail and clamped duplicate tiles are masked in-kernel; no full-array
    # pad copy is ever issued.
    mask_needed = (num_tiles * tr != rows) or (chunks * steps != num_tiles)

    if chunks * steps == num_tiles:
        def tile_index(c, s):
            return (c * steps + s, 0)
    else:
        def tile_index(c, s):
            # Clamp so no DMA is fully out of bounds; clamped duplicates are
            # zeroed by the in-kernel mask.
            return (jnp.minimum(c * steps + s, num_tiles - 1), 0)

    in_spec = pl.BlockSpec((tr, _LANES), tile_index)
    out_spec = pl.BlockSpec((1, _SUBLANES, _LANES), lambda c, s: (c, 0, 0))
    out_sds = jax.ShapeDtypeStruct((chunks, _SUBLANES, _LANES), jnp.float32)

    dp_part, dn_part = pl.pallas_call(
        _make_kernel(rows, tr, steps, mask_needed),
        out_shape=(out_sds, out_sds),
        grid=(chunks, steps),
        in_specs=[in_spec, in_spec, in_spec],
        out_specs=(out_spec, out_spec),
        compiler_params=pltpu.CompilerParams(
            dimension_semantics=("parallel", "arbitrary"),
            # 3 inputs x 2 buffers x (tr x 128) native-dtype tiles + intermediates
            # stay far below this on every generation (v7x physical = 64 MiB).
            vmem_limit_bytes=32 * 1024 * 1024,
        ),
        cost_estimate=pl.CostEstimate(
            flops=6 * total,
            transcendentals=0,
            bytes_accessed=3 * total * itemsize
            + 2 * chunks * _SUBLANES * _LANES * 4,
        ),
    )(a2, p2, n2)

    # Tiny wrapper-side finalize (~2 * chunks * 1024 floats): cross-chunk/lane
    # collapse, sqrt, Softplus(beta=1, threshold=1) (linear branch for x > 1).
    dp = jnp.sqrt(jnp.sum(dp_part))
    dn = jnp.sqrt(jnp.sum(dn_part))
    x = dp - dn
    x_safe = jnp.minimum(x, 1.0)   # keep exp() bounded on the unselected branch
    return jnp.where(x > 1.0, x, jnp.log1p(jnp.exp(x_safe)))


def _reference(anchor, positive, negative):
    a = anchor.astype(jnp.float32)
    p = positive.astype(jnp.float32)
    n = negative.astype(jnp.float32)
    dp = jnp.sqrt(jnp.sum((a - p) ** 2))
    dn = jnp.sqrt(jnp.sum((a - n) ** 2))
    x = dp - dn
    return jnp.where(x > 1.0, x, jnp.log1p(jnp.exp(jnp.minimum(x, 1.0))))


if __name__ == "__main__":
    key = jax.random.PRNGKey(0)

    def triplet(k, shape, dtype=jnp.float32):
        k_a, k_p, k_n = jax.random.split(k, 3)
        return (jax.random.normal(k_a, shape, dtype=dtype),
                jax.random.normal(k_p, shape, dtype=dtype),
                jax.random.normal(k_n, shape, dtype=dtype))

    def check(loss, ref, tag):
        jax.block_until_ready(loss)
        # dp - dn is a difference of two large sqrt-reductions: f32 reduction-order
        # differences get amplified by cancellation -> f32-appropriate tolerance.
        assert jnp.allclose(loss, ref, rtol=1e-3, atol=1e-3), (tag, loss, ref)

    k1, k2, k3 = jax.random.split(key, 3)

    # 1) Feature-map triplet (NCHW-like), default tiling: single tile, 1 chunk.
    a, p, n = triplet(k1, (2, 4, 16, 16))
    ref = _reference(a, p, n)
    check(softplus_triplet_loss(a, p, n), ref, "default")

    # 2) Same input: forced multi-step accumulation (1 chunk x 2 tiles of 8 rows)
    #    and forced 2-chunk parallel split (2 chunks x 1 tile each).
    check(softplus_triplet_loss(a, p, n, rows_per_tile=8, num_chunks=1), ref,
          "multi-step")
    check(softplus_triplet_loss(a, p, n, rows_per_tile=8, num_chunks=2), ref,
          "2-chunk")

    # 3) Ragged size (1155 elems, not a multiple of 128): lane pad + in-kernel mask.
    a, p, n = triplet(k2, (3, 5, 7, 11))
    check(softplus_triplet_loss(a, p, n, rows_per_tile=8, num_chunks=2),
          _reference(a, p, n), "ragged")

    # 4) Tile count (3) not divisible by chunks (2): clamped duplicate-tile path.
    a, p, n = triplet(k3, (2, 4, 320))
    check(softplus_triplet_loss(a, p, n, rows_per_tile=8, num_chunks=2),
          _reference(a, p, n), "clamped")

    # 5) Native bf16 inputs (sublane pack 16, no wrapper-side f32 up-cast).
    a, p, n = triplet(k1, (4, 512), dtype=jnp.bfloat16)
    check(softplus_triplet_loss(a, p, n), _reference(a, p, n), "bf16")

    print("KERNEL_OK")
</pallas_src>

<mosaic_0001>
module attributes {stable_mosaic.version = 11 : i64} {
  func.func @kernel(%arg0: i32, %arg1: i32, %arg2: memref<16x128xf32, #tpu.memory_space<vmem>>, %arg3: memref<16x128xf32, #tpu.memory_space<vmem>>, %arg4: memref<16x128xf32, #tpu.memory_space<vmem>>, %arg5: memref<1x8x128xf32, #tpu.memory_space<vmem>>, %arg6: memref<1x8x128xf32, #tpu.memory_space<vmem>>) attributes {dimension_semantics = [#tpu.dimension_semantics<parallel>, #tpu.dimension_semantics<arbitrary>], iteration_bounds = array<i64: 1, 1>, scalar_prefetch = 0 : i64, scratch_operands = 0 : i64, tpu.core_type = #tpu.core_type<tc>, window_params = [{transform_indices = @transform_0, window_bounds = array<i64: 16, 128>}, {transform_indices = @transform_1, window_bounds = array<i64: 16, 128>}, {transform_indices = @transform_2, window_bounds = array<i64: 16, 128>}, {transform_indices = @transform_3, window_bounds = array<i64: 1, 8, 128>}, {transform_indices = @transform_4, window_bounds = array<i64: 1, 8, 128>}]} {
    %c0_i32 = arith.constant 0 : i32
    %0 = arith.cmpi eq, %arg1, %c0_i32 : i32
    %1 = arith.extui %0 : i1 to i32
    %c0_i32_0 = arith.constant 0 : i32
    %2 = arith.cmpi ne, %1, %c0_i32_0 : i32
    scf.if %2 {
      %cst_19 = arith.constant 0.000000e+00 : f32
      %22 = vector.broadcast %cst_19 : f32 to vector<1x8x128xf32>
      %c0_20 = arith.constant 0 : index
      %c0_21 = arith.constant 0 : index
      %c0_22 = arith.constant 0 : index
      %23 = vector.load %arg5[%c0_20, %c0_21, %c0_22] : memref<1x8x128xf32, #tpu.memory_space<vmem>>, vector<1x8x128xf32>
      tpu.vector_store %arg5[%c0_20, %c0_21, %c0_22], %22 {strides = array<i32>} : memref<1x8x128xf32, #tpu.memory_space<vmem>>, vector<1x8x128xf32>,
      %cst_23 = arith.constant 0.000000e+00 : f32
      %24 = vector.broadcast %cst_23 : f32 to vector<1x8x128xf32>
      %c0_24 = arith.constant 0 : index
      %c0_25 = arith.constant 0 : index
      %c0_26 = arith.constant 0 : index
      %25 = vector.load %arg6[%c0_24, %c0_25, %c0_26] : memref<1x8x128xf32, #tpu.memory_space<vmem>>, vector<1x8x128xf32>
      tpu.vector_store %arg6[%c0_24, %c0_25, %c0_26], %24 {strides = array<i32>} : memref<1x8x128xf32, #tpu.memory_space<vmem>>, vector<1x8x128xf32>,
    } else {
    }
    %c0 = arith.constant 0 : index
    %c0_1 = arith.constant 0 : index
    %3 = vector.load %arg2[%c0, %c0_1] : memref<16x128xf32, #tpu.memory_space<vmem>>, vector<16x128xf32>
    %c0_2 = arith.constant 0 : index
    %c0_3 = arith.constant 0 : index
    %4 = vector.load %arg3[%c0_2, %c0_3] : memref<16x128xf32, #tpu.memory_space<vmem>>, vector<16x128xf32>
    %c0_4 = arith.constant 0 : index
    %c0_5 = arith.constant 0 : index
    %5 = vector.load %arg4[%c0_4, %c0_5] : memref<16x128xf32, #tpu.memory_space<vmem>>, vector<16x128xf32>
    %6 = arith.subf %3, %4 : vector<16x128xf32>
    %7 = arith.subf %3, %5 : vector<16x128xf32>
    %8 = arith.mulf %6, %6 : vector<16x128xf32>
    %9 = arith.mulf %7, %7 : vector<16x128xf32>
    %c0_6 = arith.constant 0 : index
    %c0_7 = arith.constant 0 : index
    %c0_8 = arith.constant 0 : index
    %10 = vector.load %arg5[%c0_6, %c0_7, %c0_8] : memref<1x8x128xf32, #tpu.memory_space<vmem>>, vector<1x8x128xf32>
    %11 = vector.shape_cast %8 : vector<16x128xf32> to vector<2x8x128xf32>
    %cst = arith.constant dense<0.000000e+00> : vector<8x128xf32>
    %12 = vector.multi_reduction <add>, %11, %cst [0] : vector<2x8x128xf32> to vector<8x128xf32>
    %13 = vector.shape_cast %12 : vector<8x128xf32> to vector<1x8x128xf32>
    %14 = arith.addf %10, %13 : vector<1x8x128xf32>
    %c0_9 = arith.constant 0 : index
    %c0_10 = arith.constant 0 : index
    %c0_11 = arith.constant 0 : index
    %15 = vector.load %arg5[%c0_9, %c0_10, %c0_11] : memref<1x8x128xf32, #tpu.memory_space<vmem>>, vector<1x8x128xf32>
    tpu.vector_store %arg5[%c0_9, %c0_10, %c0_11], %14 {strides = array<i32>} : memref<1x8x128xf32, #tpu.memory_space<vmem>>, vector<1x8x128xf32>,
    %c0_12 = arith.constant 0 : index
    %c0_13 = arith.constant 0 : index
    %c0_14 = arith.constant 0 : index
    %16 = vector.load %arg6[%c0_12, %c0_13, %c0_14] : memref<1x8x128xf32, #tpu.memory_space<vmem>>, vector<1x8x128xf32>
    %17 = vector.shape_cast %9 : vector<16x128xf32> to vector<2x8x128xf32>
    %cst_15 = arith.constant dense<0.000000e+00> : vector<8x128xf32>
    %18 = vector.multi_reduction <add>, %17, %cst_15 [0] : vector<2x8x128xf32> to vector<8x128xf32>
    %19 = vector.shape_cast %18 : vector<8x128xf32> to vector<1x8x128xf32>
    %20 = arith.addf %16, %19 : vector<1x8x128xf32>
    %c0_16 = arith.constant 0 : index
    %c0_17 = arith.constant 0 : index
    %c0_18 = arith.constant 0 : index
    %21 = vector.load %arg6[%c0_16, %c0_17, %c0_18] : memref<1x8x128xf32, #tpu.memory_space<vmem>>, vector<1x8x128xf32>
    tpu.vector_store %arg6[%c0_16, %c0_17, %c0_18], %20 {strides = array<i32>} : memref<1x8x128xf32, #tpu.memory_space<vmem>>, vector<1x8x128xf32>,
    return
  }
  func.func @transform_0(%arg0: i32, %arg1: i32) -> (i32, i32) {
    %c1_i32 = arith.constant 1 : i32
    %0 = arith.muli %arg0, %c1_i32 : i32
    %1 = arith.addi %0, %arg1 : i32
    %c0_i32 = arith.constant 0 : i32
    %c0_i32_0 = arith.constant 0 : i32
    return %1, %c0_i32 : i32, i32
  }
  func.func @transform_1(%arg0: i32, %arg1: i32) -> (i32, i32) {
    %c1_i32 = arith.constant 1 : i32
    %0 = arith.muli %arg0, %c1_i32 : i32
    %1 = arith.addi %0, %arg1 : i32
    %c0_i32 = arith.constant 0 : i32
    %c0_i32_0 = arith.constant 0 : i32
    return %1, %c0_i32 : i32, i32
  }
  func.func @transform_2(%arg0: i32, %arg1: i32) -> (i32, i32) {
    %c1_i32 = arith.constant 1 : i32
    %0 = arith.muli %arg0, %c1_i32 : i32
    %1 = arith.addi %0, %arg1 : i32
    %c0_i32 = arith.constant 0 : i32
    %c0_i32_0 = arith.constant 0 : i32
    return %1, %c0_i32 : i32, i32
  }
  func.func @transform_3(%arg0: i32, %arg1: i32) -> (i32, i32, i32) {
    %c0_i32 = arith.constant 0 : i32
    %c0_i32_0 = arith.constant 0 : i32
    %c0_i32_1 = arith.constant 0 : i32
    return %arg0, %c0_i32, %c0_i32_0 : i32, i32, i32
  }
  func.func @transform_4(%arg0: i32, %arg1: i32) -> (i32, i32, i32) {
    %c0_i32 = arith.constant 0 : i32
    %c0_i32_0 = arith.constant 0 : i32
    %c0_i32_1 = arith.constant 0 : i32
    return %arg0, %c0_i32, %c0_i32_0 : i32, i32, i32
  }
}

</mosaic_0001>

<llo_original>
// kernel: tpu_custom_call.1
$region0: #{tpu_custom_call.1}
  #allocation0 [shape = 'u32[]', space=smem, size = 0x4, offset = 0x4, fixed_abs, tag = 'smem constant byte address 0x4 - core index']
  #allocation1 [shape = 'u32[144,128]{1,0:T(1,128)}', space=vmem, size = 0x12000, scoped, tag = 'internal scratch']
  %s0 = inlined_call_operand.hbm [shape: f32[16,128], index: 0, kind: input, shape index: {}]
  %s1 = inlined_call_operand.hbm [shape: f32[16,128], index: 1, kind: input, shape index: {}]
  %s2 = inlined_call_operand.hbm [shape: f32[16,128], index: 2, kind: input, shape index: {}]
  %s3 = inlined_call_operand.hbm [shape: f32[1,8,128], index: 3, kind: output, shape index: {0}]
  %s4 = inlined_call_operand.hbm [shape: f32[1,8,128], index: 4, kind: output, shape index: {1}]
  %5 = xla_tuple %s3, %s4
  %s6 = sld [smem:[#allocation0]]
  $region46: #{tpu_custom_call.1} parent=0
    _
  %s8 = ssub.s32 1, %s6
  %s9 = scalar_select 0, %s8, %s6
  $region1: #{tpu_custom_call.1} parent=0
    #allocation2 [shape = 'u8[8192]{0}', space=vmem, size = 0x2000, scoped, tag = 'input window, operand 0, single buffered']
    #allocation3 [shape = 's32[1]{0}', space=sflag, size = 0x4, scoped, tag = 'scoped memory for tpu_custom_call.1']
    #allocation4 [shape = 's32[1]{0}', space=sflag, size = 0x4, scoped, tag = 'scoped memory for tpu_custom_call.1']
    #allocation5 [shape = 'u8[8192]{0}', space=vmem, size = 0x2000, scoped, tag = 'input window, operand 1, single buffered']
    #allocation6 [shape = 's32[1]{0}', space=sflag, size = 0x4, scoped, tag = 'scoped memory for tpu_custom_call.1']
    #allocation7 [shape = 'u8[8192]{0}', space=vmem, size = 0x2000, scoped, tag = 'input window, operand 2, single buffered']
    #allocation8 [shape = 'u8[4096]{0}', space=vmem, size = 0x1000, scoped, tag = 'output window, operand 0, single buffered']
    #allocation9 [shape = 'u8[4096]{0}', space=vmem, size = 0x1000, scoped, tag = 'output window, operand 1, single buffered']
    #allocation10 [shape = 's32[1]{0}', space=sflag, size = 0x4, scoped, tag = 'scoped memory for tpu_custom_call.1']
    %10 = vsyncpa [#allocation3], 0
    %11 = vsyncpa [#allocation6], 0
    %12 = vsyncpa [#allocation4], 0
    %13 = vsyncpa [#allocation10], 0
    // Predicated region
    $region2: #{tpu_custom_call.1} parent=1 // pred_check
      _
    $region3: #{tpu_custom_call.1} parent=1 // pred_check_branch
      %15 = sbr.rel (0) target = $region5
    $region4: #{tpu_custom_call.1} parent=1 // pred_region
      %s16 = sadd.s32 0, 0
      %s17 = smul.u32 2, %s16
      %s19 = ssub.s32 256, 256
      %20 = vsyncadd [#allocation3], %s19
      %s21 = smul.addr %s17, 128
      %s22 = scalar_lea.hbm %s0, %s21
      %s23 = sshll.u32 [#allocation2], 4
      %s24 = int_to_ptr.vmem [resolvable:$true] %s23
      %29 = dma.hbm_to_vmem [thread:$0]  %s22, 256, %s24, [#allocation3], 128, 128, 8
    $region5: #{tpu_custom_call.1} parent=1 // pred_fallthru
      _
    // Predicated region
    $region6: #{tpu_custom_call.1} parent=1 // pred_check
      _
    $region7: #{tpu_custom_call.1} parent=1 // pred_check_branch
      %31 = sbr.rel (0) target = $region9
    $region8: #{tpu_custom_call.1} parent=1 // pred_region
      %s32 = sadd.s32 0, 0
      %s33 = smul.u32 2, %s32
      %s35 = ssub.s32 256, 256
      %36 = vsyncadd [#allocation6], %s35
      %s37 = smul.addr %s33, 128
      %s38 = scalar_lea.hbm %s1, %s37
      %s39 = sshll.u32 [#allocation5], 4
      %s40 = int_to_ptr.vmem [resolvable:$true] %s39
      %45 = dma.hbm_to_vmem [thread:$0]  %s38, 256, %s40, [#allocation6], 128, 128, 8
    $region9: #{tpu_custom_call.1} parent=1 // pred_fallthru
      _
    // Predicated region
    $region10: #{tpu_custom_call.1} parent=1 // pred_check
      _
    $region11: #{tpu_custom_call.1} parent=1 // pred_check_branch
      %47 = sbr.rel (0) target = $region13
    $region12: #{tpu_custom_call.1} parent=1 // pred_region
      %s48 = sadd.s32 0, 0
      %s49 = smul.u32 2, %s48
      %s51 = ssub.s32 256, 256
      %52 = vsyncadd [#allocation6], %s51
      %s53 = smul.addr %s49, 128
      %s54 = scalar_lea.hbm %s2, %s53
      %s55 = sshll.u32 [#allocation7], 4
      %s56 = int_to_ptr.vmem [resolvable:$true] %s55
      %61 = dma.hbm_to_vmem [thread:$0]  %s54, 256, %s56, [#allocation6], 128, 128, 8
    $region13: #{tpu_custom_call.1} parent=1 // pred_fallthru
      _
    // Predicated region
    $region14: #{tpu_custom_call.1} parent=1 // pred_check
      _
    $region15: #{tpu_custom_call.1} parent=1 // pred_check_branch
      %63 = sbr.rel (0) target = $region17
    $region16: #{tpu_custom_call.1} parent=1 // pred_region
      %64 = dma.done [#allocation3], 256
    $region17: #{tpu_custom_call.1} parent=1 // pred_fallthru
      _
    // Predicated region
    $region18: #{tpu_custom_call.1} parent=1 // pred_check
      _
    $region19: #{tpu_custom_call.1} parent=1 // pred_check_branch
      %66 = sbr.rel (0) target = $region21
    $region20: #{tpu_custom_call.1} parent=1 // pred_region
      %67 = dma.done [#allocation6], 256
    $region21: #{tpu_custom_call.1} parent=1 // pred_fallthru
      _
    // Predicated region
    $region22: #{tpu_custom_call.1} parent=1 // pred_check
      _
    $region23: #{tpu_custom_call.1} parent=1 // pred_check_branch
      %69 = sbr.rel (0) target = $region25
    $region24: #{tpu_custom_call.1} parent=1 // pred_region
      %70 = dma.done [#allocation6], 256
    $region25: #{tpu_custom_call.1} parent=1 // pred_fallthru
      _
    %s71 = sadd.s32 0, 0
    %s72 = smul.u32 2, %s71
    %s73 = sadd.s32 0, 0
    %s74 = smul.u32 2, %s73
    %s75 = sadd.s32 0, 0
    %s76 = smul.u32 2, %s75
    %p77 = scmp.eq.s32.totalorder 0, 0
    // Predicated region
    $region26: #{tpu_custom_call.1} parent=1 // pred_check
      %p78 = pneg %p77
    $region27: #{tpu_custom_call.1} parent=1 // pred_check_branch
      %80 = sbr.rel (%p78) target = $region29
    $region28: #{tpu_custom_call.1} parent=1 // pred_region
      %81 = vst [vmem:[#allocation8] sm:$0xff] 0.0
      %82 = vst [vmem:[#allocation9] sm:$0xff] 0.0
    $region29: #{tpu_custom_call.1} parent=1 // pred_fallthru
      _
    %v83 = vld [vmem:[#allocation2] sm:$0xff]
    %v84 = vld [vmem:[#allocation2 + $0x8] sm:$0xff]
    %v85 = vld [vmem:[#allocation5] sm:$0xff]
    %v86 = vld [vmem:[#allocation5 + $0x8] sm:$0xff]
    %v87 = vld [vmem:[#allocation7] sm:$0xff]
    %v88 = vld [vmem:[#allocation7 + $0x8] sm:$0xff]
    %v89 = vsub.f32 %v83, %v85
    %v90 = vsub.f32 %v84, %v86
    %v91 = vsub.f32 %v83, %v87
    %v92 = vsub.f32 %v84, %v88
    %v93 = vmul.f32 %v89, %v89
    %v94 = vmul.f32 %v90, %v90
    %v95 = vmul.f32 %v91, %v91
    %v96 = vmul.f32 %v92, %v92
    %v97 = vld [vmem:[#allocation8] sm:$0xff]
    %v98 = vadd.f32 %v93, %v94
    %v99 = vadd.f32 %v97, %v98
    %100 = vst [vmem:[#allocation8] sm:$0xff] %v99
    %v101 = vld [vmem:[#allocation9] sm:$0xff]
    %v102 = vadd.f32 %v95, %v96
    %v103 = vadd.f32 %v101, %v102
    %104 = vst [vmem:[#allocation9] sm:$0xff] %v103
    // Predicated region
    $region30: #{tpu_custom_call.1} parent=1 // pred_check
      _
    $region31: #{tpu_custom_call.1} parent=1 // pred_check_branch
      %106 = sbr.rel (0) target = $region33
    $region32: #{tpu_custom_call.1} parent=1 // pred_region
      %s108 = ssub.s32 128, 128
      %109 = vsyncadd [#allocation4], %s108
      %s111 = sshll.u32 [#allocation8], 4
      %s112 = int_to_ptr.vmem [resolvable:$true] %s111
      %114 = dma.vmem_to_hbm [thread:$0]  %s112, 128, %s3, [#allocation4]
    $region33: #{tpu_custom_call.1} parent=1 // pred_fallthru
      _
    // Predicated region
    $region34: #{tpu_custom_call.1} parent=1 // pred_check
      _
    $region35: #{tpu_custom_call.1} parent=1 // pred_check_branch
      %116 = sbr.rel (0) target = $region37
    $region36: #{tpu_custom_call.1} parent=1 // pred_region
      %s118 = ssub.s32 128, 128
      %119 = vsyncadd [#allocation10], %s118
      %s121 = sshll.u32 [#allocation9], 4
      %s122 = int_to_ptr.vmem [resolvable:$true] %s121
      %124 = dma.vmem_to_hbm [thread:$0]  %s122, 128, %s4, [#allocation10]
    $region37: #{tpu_custom_call.1} parent=1 // pred_fallthru
      _
    // Predicated region
    $region38: #{tpu_custom_call.1} parent=1 // pred_check
      _
    $region39: #{tpu_custom_call.1} parent=1 // pred_check_branch
      %126 = sbr.rel (0) target = $region41
    $region40: #{tpu_custom_call.1} parent=1 // pred_region
      %127 = dma.done [#allocation4], 128
    $region41: #{tpu_custom_call.1} parent=1 // pred_fallthru
      _
    // Predicated region
    $region42: #{tpu_custom_call.1} parent=1 // pred_check
      _
    $region43: #{tpu_custom_call.1} parent=1 // pred_check_branch
      %129 = sbr.rel (0) target = $region45
    $region44: #{tpu_custom_call.1} parent=1 // pred_region
      %130 = dma.done [#allocation10], 128
    $region45: #{tpu_custom_call.1} parent=1 // pred_fallthru
      _
    %131 = vsyncpa [#allocation3], 1
    %132 = vsyncpa [#allocation6], 1
    %133 = vsyncpa [#allocation4], 1
    %134 = vsyncpa [#allocation10], 1

</llo_original>
